<compile_context>
chip_gen: v5e
topology: v5e:2x2
jax: 0.10.0
libtpu: 0.0.40
codegen_flags: <defaults>
</compile_context>

<pallas_src>
import functools
import math

import jax
import jax.numpy as jnp
from jax.experimental import pallas as pl
from jax.experimental.pallas import tpu as pltpu

_F32, _BF16 = 4, 2


def _attention_kernel(x_ref, w_ref, b_ref, out_ref, *maybe_attn_ref):
    """One grid step: a (b_blk, T, H) batch block, fully resident in VMEM."""
    # bf16 operands for every MXU matmul, f32 accumulation (MXU-native path).
    x = x_ref[...].astype(jnp.bfloat16)

    # Three lane-aligned projections from the (3, H, H) weight stack; the
    # 1/sqrt(H) scale is already folded into w_ref[0]/b_ref[0] by the wrapper.
    # Contracting directly on the 3-D block lets Mosaic collapse leading dims.
    q = jnp.einsum("bth,hd->btd", x, w_ref[0],
                   preferred_element_type=jnp.float32) + b_ref[0]
    k = jnp.einsum("bth,hd->btd", x, w_ref[1],
                   preferred_element_type=jnp.float32) + b_ref[1]
    v = jnp.einsum("bth,hd->btd", x, w_ref[2],
                   preferred_element_type=jnp.float32) + b_ref[2]

    # scores = Q K^T, contracting the hidden dim directly (no K relayout).
    scores = jnp.einsum("bqd,bkd->bqk", q.astype(jnp.bfloat16),
                        k.astype(jnp.bfloat16),
                        preferred_element_type=jnp.float32)

    # Numerically stable softmax over the key axis (f32).
    m = jnp.max(scores, axis=-1, keepdims=True)
    e = jnp.exp(scores - m)
    denom = jnp.sum(e, axis=-1, keepdims=True)

    v_bf = v.astype(jnp.bfloat16)
    if maybe_attn_ref:                      # static: attn output requested
        # Returned weights must be exactly normalized (rows sum to 1).
        attn = e / denom
        ctx = jnp.einsum("bqk,bkd->bqd", attn.astype(jnp.bfloat16), v_bf,
                         preferred_element_type=jnp.float32)
        maybe_attn_ref[0][...] = attn.astype(maybe_attn_ref[0].dtype)
    else:
        # Deferred normalization: scale the (T, H) context instead of the
        # (T, T) matrix, using the EUP approximate reciprocal (idle slot).
        ctx = jnp.einsum("bqk,bkd->bqd", e.astype(jnp.bfloat16), v_bf,
                         preferred_element_type=jnp.float32)
        ctx = ctx * pl.reciprocal(denom, approx=True)

    out_ref[...] = ctx.astype(out_ref.dtype)


@functools.lru_cache(maxsize=None)
def _single_buffer_weights_supported():
    """One-time capability probe: does this build accept pl.Buffered(1) specs?

    Narrow-purpose: only a tiny probe kernel is compiled here; the real kernel
    is never wrapped in a try/except."""
    try:
        def _probe(x_ref, o_ref):
            o_ref[...] = x_ref[...]

        call = pl.pallas_call(
            _probe,
            out_shape=jax.ShapeDtypeStruct((8, 128), jnp.float32),
            grid=(1,),
            in_specs=[pl.BlockSpec((8, 128), lambda i: (0, 0),
                                   pipeline_mode=pl.Buffered(1))],
            out_specs=pl.BlockSpec((8, 128), lambda i: (0, 0)),
        )
        jax.jit(call).lower(
            jax.ShapeDtypeStruct((8, 128), jnp.float32)).compile()
        return True
    except Exception:
        return False


def _vmem_capacity_bytes():
    """Physical per-core VMEM (64 MiB on v7x, 128 MiB on v5e/v6e)."""
    try:
        cap = getattr(pltpu.get_tpu_info(), "vmem_capacity_bytes", None)
        if cap:
            return int(cap)
    except Exception:   # info query only; fall back to the smallest generation
        pass
    return 64 * 1024 * 1024


def _estimate_vmem_bytes(b_blk, T, H, return_attn, weight_buffers, x_bytes=_F32):
    """Complete working-set estimate for one grid step (weights included)."""
    per_b = (
        2 * T * H * x_bytes        # x input tile (double-buffered)
        + 2 * T * H * _F32         # context output tile (double-buffered)
        + 4 * T * H * _F32         # live q / k / v / ctx (f32)
        + 3 * T * H * _BF16        # bf16 copies of x / q / k fed to the MXU
        + 3 * T * T * _F32         # live scores, exp, attn (all resident)
    )
    if return_attn:
        per_b += 2 * T * T * _F32  # attn output tile (double-buffered)
    fixed = weight_buffers * (3 * H * H * _BF16 + 3 * H * _F32)   # W_qkv + b_qkv
    return fixed + b_blk * per_b


def _choose_batch_block(B, T, H, return_attn, budget_bytes, two_tensorcores,
                        weight_buffers):
    """Largest divisor of B whose complete working set fits `budget_bytes`,
    preferring MXU-friendly M = b_blk*T (multiple of 256, then 128).  On
    two-TensorCore chips (v7x) the grid is kept >= 2 steps when B >= 2; on
    single-TC v5e/v6e the largest fitting block is used."""
    max_blk = B
    if two_tensorcores and B >= 2:
        max_blk = max(1, B // 2)
    fitting = [d for d in range(1, max_blk + 1)
               if B % d == 0
               and _estimate_vmem_bytes(d, T, H, return_attn,
                                        weight_buffers) <= budget_bytes]
    if not fitting:
        return 1
    return max(fitting,
               key=lambda d: ((d * T) % 256 == 0, (d * T) % 128 == 0, d))


def _make_call(B, T, H, b_blk, dtype, return_attn, single_buffer_weights,
               vmem_limit_bytes):
    const_kwargs = {}
    if single_buffer_weights:
        # Grid-invariant weights/biases: one VMEM buffer suffices; the default
        # double buffer would waste 3*H*H*2 extra bytes (6 MiB at H=1024).
        const_kwargs = dict(pipeline_mode=pl.Buffered(1))

    in_specs = [
        pl.BlockSpec((b_blk, T, H), lambda b: (b, 0, 0)),               # x
        pl.BlockSpec((3, H, H), lambda b: (0, 0, 0), **const_kwargs),   # W_qkv (in,out) bf16
        pl.BlockSpec((3, 1, H), lambda b: (0, 0, 0), **const_kwargs),   # b_qkv f32
    ]
    out_shape = [jax.ShapeDtypeStruct((B, T, H), dtype)]
    out_specs = [pl.BlockSpec((b_blk, T, H), lambda b: (b, 0, 0))]
    if return_attn:
        # NOTE: when T is not a multiple of 128 this store is lane-masked
        # (costly on v5e's single store slot); prefer return_attn=False or a
        # 128-padded T when the weights are not needed downstream.
        out_shape.append(jax.ShapeDtypeStruct((B, T, T), dtype))
        out_specs.append(pl.BlockSpec((b_blk, T, T), lambda b: (b, 0, 0)))

    return pl.pallas_call(
        _attention_kernel,
        out_shape=tuple(out_shape),
        grid=(B // b_blk,),
        in_specs=in_specs,
        out_specs=tuple(out_specs),
        compiler_params=pltpu.CompilerParams(
            dimension_semantics=("parallel",),
            vmem_limit_bytes=vmem_limit_bytes,
        ),
    )


def prepare_qkv_params(wq, bq, wk, bk, wv, bv):
    """One-time parameter prep (hoisted out of the per-call path):
    torch (out, in) -> (in, out), stack into (3, H, H), fold 1/sqrt(H) into
    the Q weights/bias, cast weights to bf16 (halves their VMEM footprint)."""
    H = wq.shape[0]
    scale = 1.0 / math.sqrt(float(H))
    wqkv = jnp.stack([wq.T * scale, wk.T, wv.T], axis=0).astype(jnp.bfloat16)
    bqkv = jnp.stack([bq * scale, bk, bv], axis=0).reshape(3, 1, H)
    return wqkv, bqkv.astype(jnp.float32)


def temporal_attention(x, wqkv, bqkv, *, return_attn=True, batch_block=None):
    """x: (B, T, H).  wqkv/bqkv: output of prepare_qkv_params (call it once)."""
    B, T, H = x.shape
    assert wqkv.shape == (3, H, H) and bqkv.shape == (3, 1, H)

    capacity = _vmem_capacity_bytes()
    budget = int(capacity * 0.70)                     # ~45 MiB v7x, ~90 MiB v5e/v6e
    two_tensorcores = capacity <= 64 * 1024 * 1024    # v7x heuristic (64 MiB/TC)
    single_buf = _single_buffer_weights_supported()
    weight_buffers = 1 if single_buf else 2

    if batch_block is None:
        batch_block = _choose_batch_block(B, T, H, return_attn, budget,
                                          two_tensorcores, weight_buffers)
    if B % batch_block != 0:
        raise ValueError(f"batch_block={batch_block} must divide B={B}")

    est = _estimate_vmem_bytes(batch_block, T, H, return_attn, weight_buffers)
    if est > int(capacity * 0.95):
        # TODO(synk): add a key-axis (flash-style online-softmax) grid dimension
        # so the T*T scores/exp working set streams through VMEM for large T
        # (needed on v7x's 64 MiB VMEM once T reaches ~1k).
        raise ValueError(
            f"T={T} working set (~{est} B) exceeds VMEM ({capacity} B); a "
            "key-tiled online-softmax variant is required for this size")

    vmem_limit = int(min(capacity * 0.95, max(budget, est * 5 // 4)))
    call = _make_call(B, T, H, batch_block, x.dtype, return_attn, single_buf,
                      vmem_limit)
    result = call(x, wqkv, bqkv)
    return result if return_attn else result[0]


def _reference(x, wq, bq, wk, bk, wv, bv):
    """Pure-JAX reference matching the PyTorch forward exactly."""
    q = x @ wq.T + bq
    k = x @ wk.T + bk
    v = x @ wv.T + bv
    scores = jnp.einsum("bth,bsh->bts", q, k) / (x.shape[-1] ** 0.5)
    attn = jax.nn.softmax(scores, axis=-1)
    return jnp.einsum("bts,bsh->bth", attn, v), attn


if __name__ == "__main__":
    B, T, H = 2, 8, 32   # batch=2, seq_len=8, hidden_dim=32

    key = jax.random.PRNGKey(0)
    kx, kq, kbq, kk, kbk, kv, kbv = jax.random.split(key, 7)

    x = jax.random.normal(kx, (B, T, H), dtype=jnp.float32)

    # Deterministic parameter init (uniform, like torch.nn.Linear default scale).
    bound = 1.0 / math.sqrt(H)
    wq = jax.random.uniform(kq, (H, H), jnp.float32, -bound, bound)
    bq = jax.random.uniform(kbq, (H,), jnp.float32, -bound, bound)
    wk = jax.random.uniform(kk, (H, H), jnp.float32, -bound, bound)
    bk = jax.random.uniform(kbk, (H,), jnp.float32, -bound, bound)
    wv = jax.random.uniform(kv, (H, H), jnp.float32, -bound, bound)
    bv = jax.random.uniform(kbv, (H,), jnp.float32, -bound, bound)

    # Parameter prep is hoisted out of the per-call path (done exactly once).
    wqkv, bqkv = prepare_qkv_params(wq, bq, wk, bk, wv, bv)

    out, attn = temporal_attention(x, wqkv, bqkv, return_attn=True)
    out = jax.block_until_ready(out)
    attn = jax.block_until_ready(attn)

    ref_out, ref_attn = _reference(x, wq, bq, wk, bk, wv, bv)

    # Tolerance reflects bf16 MXU operands (f32 accumulation); softmax itself
    # runs in f32 and the returned attn rows are exactly normalized.
    assert out.shape == (B, T, H) and attn.shape == (B, T, T)
    assert jnp.allclose(out, ref_out, atol=3e-2, rtol=3e-2), "context mismatch"
    assert jnp.allclose(attn, ref_attn, atol=3e-2, rtol=3e-2), "attn mismatch"
    assert jnp.allclose(jnp.sum(attn, axis=-1), 1.0, atol=1e-5), "attn rows not normalized"

    # Attn-free fast path (lane-dense output only, deferred normalization).
    out_fast = jax.block_until_ready(
        temporal_attention(x, wqkv, bqkv, return_attn=False))
    assert jnp.allclose(out_fast, ref_out, atol=3e-2, rtol=3e-2), "fast-path mismatch"

    print("KERNEL_OK")
</pallas_src>

<mosaic_0001>
module attributes {stable_mosaic.version = 11 : i64} {
  func.func @_attention_kernel(%arg0: i32, %arg1: memref<1x8x32xf32, #tpu.memory_space<vmem>>, %arg2: memref<3x32x32xbf16, #tpu.memory_space<vmem>>, %arg3: memref<3x1x32xf32, #tpu.memory_space<vmem>>, %arg4: memref<1x8x32xf32, #tpu.memory_space<vmem>>, %arg5: memref<1x8x8xf32, #tpu.memory_space<vmem>>) attributes {dimension_semantics = [#tpu.dimension_semantics<parallel>], iteration_bounds = array<i64: 2>, scalar_prefetch = 0 : i64, scratch_operands = 0 : i64, tpu.core_type = #tpu.core_type<tc>, window_params = [{transform_indices = @transform_0, window_bounds = array<i64: 1, 8, 32>}, {pipeline_mode = #tpu.pipeline_mode<synchronous>, transform_indices = @transform_1, window_bounds = array<i64: 3, 32, 32>}, {pipeline_mode = #tpu.pipeline_mode<synchronous>, transform_indices = @transform_2, window_bounds = array<i64: 3, 1, 32>}, {transform_indices = @transform_3, window_bounds = array<i64: 1, 8, 32>}, {transform_indices = @transform_4, window_bounds = array<i64: 1, 8, 8>}]} {
    %c0 = arith.constant 0 : index
    %c0_0 = arith.constant 0 : index
    %c0_1 = arith.constant 0 : index
    %0 = vector.load %arg1[%c0, %c0_0, %c0_1] : memref<1x8x32xf32, #tpu.memory_space<vmem>>, vector<1x8x32xf32>
    %1 = arith.truncf %0 : vector<1x8x32xf32> to vector<1x8x32xbf16>
    %c0_2 = arith.constant 0 : index
    %c0_3 = arith.constant 0 : index
    %c0_4 = arith.constant 0 : index
    %2 = vector.load %arg2[%c0_2, %c0_3, %c0_4] : memref<3x32x32xbf16, #tpu.memory_space<vmem>>, vector<1x32x32xbf16>
    %3 = vector.shape_cast %2 : vector<1x32x32xbf16> to vector<32x32xbf16>
    "tpu.trace_start"() <{level = 10 : i32, message = "bth,hd->btd"}> : () -> ()
    %cst = arith.constant dense<0.000000e+00> : vector<1x8x32xf32>
    %4 = tpu.matmul %1, %3, %cst {dimension_numbers = #tpu.dot_dimension_numbers<[2], [0], [0, 1], [1], [0, 0, 0, 1, 1, 1], [], []>} : vector<1x8x32xbf16>, vector<32x32xbf16>, vector<1x8x32xf32> -> vector<1x8x32xf32>
    "tpu.trace_stop"() : () -> ()
    %c0_5 = arith.constant 0 : index
    %c0_6 = arith.constant 0 : index
    %c0_7 = arith.constant 0 : index
    %5 = vector.load %arg3[%c0_5, %c0_6, %c0_7] : memref<3x1x32xf32, #tpu.memory_space<vmem>>, vector<1x1x32xf32>
    %6 = vector.shape_cast %5 : vector<1x1x32xf32> to vector<1x32xf32>
    %7 = vector.shape_cast %6 : vector<1x32xf32> to vector<1x1x32xf32>
    %8 = vector.broadcast %7 : vector<1x1x32xf32> to vector<1x8x32xf32>
    %9 = arith.addf %4, %8 : vector<1x8x32xf32>
    %c1 = arith.constant 1 : index
    %c0_8 = arith.constant 0 : index
    %c0_9 = arith.constant 0 : index
    %10 = vector.load %arg2[%c1, %c0_8, %c0_9] : memref<3x32x32xbf16, #tpu.memory_space<vmem>>, vector<1x32x32xbf16>
    %11 = vector.shape_cast %10 : vector<1x32x32xbf16> to vector<32x32xbf16>
    "tpu.trace_start"() <{level = 10 : i32, message = "bth,hd->btd"}> : () -> ()
    %cst_10 = arith.constant dense<0.000000e+00> : vector<1x8x32xf32>
    %12 = tpu.matmul %1, %11, %cst_10 {dimension_numbers = #tpu.dot_dimension_numbers<[2], [0], [0, 1], [1], [0, 0, 0, 1, 1, 1], [], []>} : vector<1x8x32xbf16>, vector<32x32xbf16>, vector<1x8x32xf32> -> vector<1x8x32xf32>
    "tpu.trace_stop"() : () -> ()
    %c1_11 = arith.constant 1 : index
    %c0_12 = arith.constant 0 : index
    %c0_13 = arith.constant 0 : index
    %13 = vector.load %arg3[%c1_11, %c0_12, %c0_13] : memref<3x1x32xf32, #tpu.memory_space<vmem>>, vector<1x1x32xf32>
    %14 = vector.shape_cast %13 : vector<1x1x32xf32> to vector<1x32xf32>
    %15 = vector.shape_cast %14 : vector<1x32xf32> to vector<1x1x32xf32>
    %16 = vector.broadcast %15 : vector<1x1x32xf32> to vector<1x8x32xf32>
    %17 = arith.addf %12, %16 : vector<1x8x32xf32>
    %c2 = arith.constant 2 : index
    %c0_14 = arith.constant 0 : index
    %c0_15 = arith.constant 0 : index
    %18 = vector.load %arg2[%c2, %c0_14, %c0_15] : memref<3x32x32xbf16, #tpu.memory_space<vmem>>, vector<1x32x32xbf16>
    %19 = vector.shape_cast %18 : vector<1x32x32xbf16> to vector<32x32xbf16>
    "tpu.trace_start"() <{level = 10 : i32, message = "bth,hd->btd"}> : () -> ()
    %cst_16 = arith.constant dense<0.000000e+00> : vector<1x8x32xf32>
    %20 = tpu.matmul %1, %19, %cst_16 {dimension_numbers = #tpu.dot_dimension_numbers<[2], [0], [0, 1], [1], [0, 0, 0, 1, 1, 1], [], []>} : vector<1x8x32xbf16>, vector<32x32xbf16>, vector<1x8x32xf32> -> vector<1x8x32xf32>
    "tpu.trace_stop"() : () -> ()
    %c2_17 = arith.constant 2 : index
    %c0_18 = arith.constant 0 : index
    %c0_19 = arith.constant 0 : index
    %21 = vector.load %arg3[%c2_17, %c0_18, %c0_19] : memref<3x1x32xf32, #tpu.memory_space<vmem>>, vector<1x1x32xf32>
    %22 = vector.shape_cast %21 : vector<1x1x32xf32> to vector<1x32xf32>
    %23 = vector.shape_cast %22 : vector<1x32xf32> to vector<1x1x32xf32>
    %24 = vector.broadcast %23 : vector<1x1x32xf32> to vector<1x8x32xf32>
    %25 = arith.addf %20, %24 : vector<1x8x32xf32>
    %26 = arith.truncf %9 : vector<1x8x32xf32> to vector<1x8x32xbf16>
    %27 = arith.truncf %17 : vector<1x8x32xf32> to vector<1x8x32xbf16>
    "tpu.trace_start"() <{level = 10 : i32, message = "bqd,bkd->bqk"}> : () -> ()
    %cst_20 = arith.constant dense<0.000000e+00> : vector<1x8x8xf32>
    %28 = tpu.matmul %26, %27, %cst_20 {dimension_numbers = #tpu.dot_dimension_numbers<[2], [2], [1], [1], [0, 0, 0, 1, 1, 1], [0], [0]>} : vector<1x8x32xbf16>, vector<1x8x32xbf16>, vector<1x8x8xf32> -> vector<1x8x8xf32>
    "tpu.trace_stop"() : () -> ()
    %cst_21 = arith.constant dense<0xFF800000> : vector<1x8xf32>
    %29 = vector.multi_reduction <maximumf>, %28, %cst_21 [2] : vector<1x8x8xf32> to vector<1x8xf32>
    %30 = vector.shape_cast %29 : vector<1x8xf32> to vector<1x8x1xf32>
    %31 = vector.broadcast %30 : vector<1x8x1xf32> to vector<1x8x8xf32>
    %32 = arith.subf %28, %31 : vector<1x8x8xf32>
    %33 = math.exp %32 : vector<1x8x8xf32>
    %cst_22 = arith.constant dense<0.000000e+00> : vector<1x8xf32>
    %34 = vector.multi_reduction <add>, %33, %cst_22 [2] : vector<1x8x8xf32> to vector<1x8xf32>
    %35 = vector.shape_cast %34 : vector<1x8xf32> to vector<1x8x1xf32>
    %36 = arith.truncf %25 : vector<1x8x32xf32> to vector<1x8x32xbf16>
    %37 = vector.broadcast %35 : vector<1x8x1xf32> to vector<1x8x8xf32>
    %38 = arith.divf %33, %37 : vector<1x8x8xf32>
    %39 = arith.truncf %38 : vector<1x8x8xf32> to vector<1x8x8xbf16>
    "tpu.trace_start"() <{level = 10 : i32, message = "bqk,bkd->bqd"}> : () -> ()
    %cst_23 = arith.constant dense<0.000000e+00> : vector<1x8x32xf32>
    %40 = tpu.matmul %39, %36, %cst_23 {dimension_numbers = #tpu.dot_dimension_numbers<[2], [1], [1], [2], [0, 0, 0, 1, 1, 2], [0], [0]>} : vector<1x8x8xbf16>, vector<1x8x32xbf16>, vector<1x8x32xf32> -> vector<1x8x32xf32>
    "tpu.trace_stop"() : () -> ()
    %c0_24 = arith.constant 0 : index
    %c0_25 = arith.constant 0 : index
    %c0_26 = arith.constant 0 : index
    %41 = vector.load %arg5[%c0_24, %c0_25, %c0_26] : memref<1x8x8xf32, #tpu.memory_space<vmem>>, vector<1x8x8xf32>
    tpu.vector_store %arg5[%c0_24, %c0_25, %c0_26], %38 {strides = array<i32>} : memref<1x8x8xf32, #tpu.memory_space<vmem>>, vector<1x8x8xf32>,
    %c0_27 = arith.constant 0 : index
    %c0_28 = arith.constant 0 : index
    %c0_29 = arith.constant 0 : index
    %42 = vector.load %arg4[%c0_27, %c0_28, %c0_29] : memref<1x8x32xf32, #tpu.memory_space<vmem>>, vector<1x8x32xf32>
    tpu.vector_store %arg4[%c0_27, %c0_28, %c0_29], %40 {strides = array<i32>} : memref<1x8x32xf32, #tpu.memory_space<vmem>>, vector<1x8x32xf32>,
    return
  }
  func.func @transform_0(%arg0: i32) -> (i32, i32, i32) {
    %c0_i32 = arith.constant 0 : i32
    %c0_i32_0 = arith.constant 0 : i32
    %c0_i32_1 = arith.constant 0 : i32
    return %arg0, %c0_i32, %c0_i32_0 : i32, i32, i32
  }
  func.func @transform_1(%arg0: i32) -> (i32, i32, i32) {
    %c0_i32 = arith.constant 0 : i32
    %c0_i32_0 = arith.constant 0 : i32
    %c0_i32_1 = arith.constant 0 : i32
    %c0_i32_2 = arith.constant 0 : i32
    return %c0_i32, %c0_i32_0, %c0_i32_1 : i32, i32, i32
  }
  func.func @transform_2(%arg0: i32) -> (i32, i32, i32) {
    %c0_i32 = arith.constant 0 : i32
    %c0_i32_0 = arith.constant 0 : i32
    %c0_i32_1 = arith.constant 0 : i32
    %c0_i32_2 = arith.constant 0 : i32
    return %c0_i32, %c0_i32_0, %c0_i32_1 : i32, i32, i32
  }
  func.func @transform_3(%arg0: i32) -> (i32, i32, i32) {
    %c0_i32 = arith.constant 0 : i32
    %c0_i32_0 = arith.constant 0 : i32
    %c0_i32_1 = arith.constant 0 : i32
    return %arg0, %c0_i32, %c0_i32_0 : i32, i32, i32
  }
  func.func @transform_4(%arg0: i32) -> (i32, i32, i32) {
    %c0_i32 = arith.constant 0 : i32
    %c0_i32_0 = arith.constant 0 : i32
    %c0_i32_1 = arith.constant 0 : i32
    return %arg0, %c0_i32, %c0_i32_0 : i32, i32, i32
  }
}

</mosaic_0001>

<llo_original>
// kernel: tpu_custom_call.1
$region0: #{tpu_custom_call.1}
  #allocation0 [shape = 'u32[]', space=smem, size = 0x4, offset = 0x4, fixed_abs, tag = 'smem constant byte address 0x4 - core index']
  #allocation1 [shape = 'u32[72,128]{1,0:T(1,128)}', space=vmem, size = 0x9000, scoped, tag = 'internal scratch']
  %s0 = inlined_call_operand.hbm [shape: f32[2,8,32], index: 0, kind: input, shape index: {}]
  %s1 = inlined_call_operand.hbm [shape: bf16[3,32,32], index: 1, kind: input, shape index: {}]
  %s2 = inlined_call_operand.hbm [shape: f32[3,1,32], index: 2, kind: input, shape index: {}]
  %s3 = inlined_call_operand.hbm [shape: f32[2,8,32], index: 3, kind: output, shape index: {0}]
  %s4 = inlined_call_operand.hbm [shape: f32[2,8,8], index: 4, kind: output, shape index: {1}]
  %5 = xla_tuple %s3, %s4
  %s6 = sld [smem:[#allocation0]]
  $region65: #{tpu_custom_call.1} parent=0
    _
  %s8 = ssub.s32 1, %s6
  %s9 = scalar_select 0, %s8, %s6
  $region1: #{tpu_custom_call.1} parent=0
    #allocation2 [shape = 'u8[8192]{0}', space=vmem, size = 0x2000, scoped, tag = 'input window, operand 0']
    #allocation3 [shape = 's32[2]{0}', space=sflag, size = 0x8, scoped, tag = 'scoped memory for tpu_custom_call.1']
    #allocation4 [shape = 's32[2]{0}', space=sflag, size = 0x8, scoped, tag = 'scoped memory for tpu_custom_call.1']
    #allocation5 [shape = 'u8[24576]{0}', space=vmem, size = 0x6000, scoped, tag = 'input window, operand 1, single buffered']
    #allocation6 [shape = 's32[1]{0}', space=sflag, size = 0x4, scoped, tag = 'scoped memory for tpu_custom_call.1']
    #allocation7 [shape = 'u8[1536]{0}', space=vmem, size = 0x800, scoped, tag = 'input window, operand 2, single buffered']
    #allocation8 [shape = 'u8[8192]{0}', space=vmem, size = 0x2000, scoped, tag = 'output window, operand 0']
    #allocation9 [shape = 'u8[8192]{0}', space=vmem, size = 0x2000, scoped, tag = 'output window, operand 1']
    #allocation10 [shape = 's32[2]{0}', space=sflag, size = 0x8, scoped, tag = 'scoped memory for tpu_custom_call.1']
    %10 = vsyncpa [#allocation3], 0
    %s11 = scalar_lea.sflag [#allocation3], 1
    %12 = vsyncpa %s11, 0
    %13 = vsyncpa [#allocation6], 0
    %14 = vsyncpa [#allocation4], 0
    %s15 = scalar_lea.sflag [#allocation4], 1
    %16 = vsyncpa %s15, 0
    %17 = vsyncpa [#allocation10], 0
    %s18 = scalar_lea.sflag [#allocation10], 1
    %19 = vsyncpa %s18, 0
    loop: start=0, step=1, limit=4
    $region2: #{tpu_custom_call.1} parent=1 // loop_pre_header
      _
    $region3: #{tpu_custom_call.1} parent=1 // loop_header
      %s21 = sphi 0, %s25
      %p22 = scmp.ge.s32.totalorder %s21, 4
      %s31 = sphi 0, %s33
      %s34 = sphi 0, %s31
      %s35 = sphi 0, %s34
      %s51 = sphi 0, %s35
      %s55 = sphi 0, %s55
      %s57 = sphi 0, %s55
      %s58 = sphi 0, %s57
      %s72 = sphi 0, %s58
      %s76 = sphi 0, %s76
      %s78 = sphi 0, %s76
      %s79 = sphi 0, %s78
      %s93 = sphi 0, %s79
      %s99 = sphi 0, %s101
      %s102 = sphi 0, %s99
      %s103 = sphi 0, %s102
      %s119 = sphi 0, %s103
      %s125 = sphi 0, %s127
      %s128 = sphi 0, %s125
      %s129 = sphi 0, %s128
      %s145 = sphi 0, %s129
    $region4: #{tpu_custom_call.1} parent=1 // loop_header_branch
      %24 = sbr.rel (%p22) target = $region8
    $region5: #{tpu_custom_call.1} parent=1 // loop_body
      %s26 = ssub.s32 %s21, 1
      %s27 = ssub.s32 %s21, 2
      %s28 = sadd.s32 %s21, 1
      %s29 = ssub.s32 %s21, %s28
      %p30 = scmp.eq.s32.totalorder %s29, 0
      %s32 = sadd.s32 %s31, 1
      %s33 = scalar_select %p30, %s31, %s32
      %p36 = pneg %p30
      %p37 = scmp.eq.s32.totalorder %s21, 1
      %p38 = por %p36, %p37
      %p39 = scmp.ne.s32.totalorder %s31, %s34
      %p40 = scmp.eq.s32.totalorder %s21, 0
      %p41 = por %p39, %p40
      %p42 = scmp.ne.s32.totalorder %s31, %s34
      %p43 = scmp.eq.s32.totalorder %s26, 1
      %p44 = por %p42, %p43
      %p45 = scmp.ne.s32.totalorder %s34, %s35
      %p46 = scmp.eq.s32.totalorder %s26, 0
      %p47 = por %p45, %p46
      %p48 = scmp.ne.s32.totalorder %s34, %s35
      %p49 = scmp.eq.s32.totalorder %s27, 1
      %p50 = por %p48, %p49
      %p52 = scmp.ne.s32.totalorder %s35, %s51
      %p53 = scmp.eq.s32.totalorder %s27, 0
      %p54 = por %p52, %p53
      %s56 = sadd.s32 %s55, 1
      %p59 = scmp.eq.s32.totalorder %s21, 1
      %p60 = scmp.ne.s32.totalorder %s55, %s57
      %p61 = scmp.eq.s32.totalorder %s21, 0
      %p62 = por %p60, %p61
      %p63 = scmp.ne.s32.totalorder %s55, %s57
      %p64 = scmp.eq.s32.totalorder %s26, 1
      %p65 = por %p63, %p64
      %p66 = scmp.ne.s32.totalorder %s57, %s58
      %p67 = scmp.eq.s32.totalorder %s26, 0
      %p68 = por %p66, %p67
      %p69 = scmp.ne.s32.totalorder %s57, %s58
      %p70 = scmp.eq.s32.totalorder %s27, 1
      %p71 = por %p69, %p70
      %p73 = scmp.ne.s32.totalorder %s58, %s72
      %p74 = scmp.eq.s32.totalorder %s27, 0
      %p75 = por %p73, %p74
      %s77 = sadd.s32 %s76, 1
      %p80 = scmp.eq.s32.totalorder %s21, 1
      %p81 = scmp.ne.s32.totalorder %s76, %s78
      %p82 = scmp.eq.s32.totalorder %s21, 0
      %p83 = por %p81, %p82
      %p84 = scmp.ne.s32.totalorder %s76, %s78
      %p85 = scmp.eq.s32.totalorder %s26, 1
      %p86 = por %p84, %p85
      %p87 = scmp.ne.s32.totalorder %s78, %s79
      %p88 = scmp.eq.s32.totalorder %s26, 0
      %p89 = por %p87, %p88
      %p90 = scmp.ne.s32.totalorder %s78, %s79
      %p91 = scmp.eq.s32.totalorder %s27, 1
      %p92 = por %p90, %p91
      %p94 = scmp.ne.s32.totalorder %s79, %s93
      %p95 = scmp.eq.s32.totalorder %s27, 0
      %p96 = por %p94, %p95
      %s97 = ssub.s32 %s21, %s28
      %p98 = scmp.eq.s32.totalorder %s97, 0
      %s100 = sadd.s32 %s99, 1
      %s101 = scalar_select %p98, %s99, %s100
      %p104 = pneg %p98
      %p105 = scmp.eq.s32.totalorder %s21, 1
      %p106 = por %p104, %p105
      %p107 = scmp.ne.s32.totalorder %s99, %s102
      %p108 = scmp.eq.s32.totalorder %s21, 0
      %p109 = por %p107, %p108
      %p110 = scmp.ne.s32.totalorder %s99, %s102
      %p111 = scmp.eq.s32.totalorder %s26, 1
      %p112 = por %p110, %p111
      %p113 = scmp.ne.s32.totalorder %s102, %s103
      %p114 = scmp.eq.s32.totalorder %s26, 0
      %p115 = por %p113, %p114
      %p116 = scmp.ne.s32.totalorder %s102, %s103
      %p117 = scmp.eq.s32.totalorder %s27, 1
      %p118 = por %p116, %p117
      %p120 = scmp.ne.s32.totalorder %s103, %s119
      %p121 = scmp.eq.s32.totalorder %s27, 0
      %p122 = por %p120, %p121
      %s123 = ssub.s32 %s21, %s28
      %p124 = scmp.eq.s32.totalorder %s123, 0
      %s126 = sadd.s32 %s125, 1
      %s127 = scalar_select %p124, %s125, %s126
      %p130 = pneg %p124
      %p131 = scmp.eq.s32.totalorder %s21, 1
      %p132 = por %p130, %p131
      %p133 = scmp.ne.s32.totalorder %s125, %s128
      %p134 = scmp.eq.s32.totalorder %s21, 0
      %p135 = por %p133, %p134
      %p136 = scmp.ne.s32.totalorder %s125, %s128
      %p137 = scmp.eq.s32.totalorder %s26, 1
      %p138 = por %p136, %p137
      %p139 = scmp.ne.s32.totalorder %s128, %s129
      %p140 = scmp.eq.s32.totalorder %s26, 0
      %p141 = por %p139, %p140
      %p142 = scmp.ne.s32.totalorder %s128, %s129
      %p143 = scmp.eq.s32.totalorder %s27, 1
      %p144 = por %p142, %p143
      %p146 = scmp.ne.s32.totalorder %s129, %s145
      %p147 = scmp.eq.s32.totalorder %s27, 0
      %p148 = por %p146, %p147
      %p149 = scmp.le.s32.totalorder 1, %s21
      %p150 = scmp.lt.s32.totalorder %s21, 3
      %p151 = pnand %p149, %p150
      %p152 = pneg %p151
      // Predicated region
      $region9: #{tpu_custom_call.1} parent=5 // pred_check
        _
      $region10: #{tpu_custom_call.1} parent=5 // pred_check_branch
        %154 = sbr.rel (%p151) target = $region12
      $region11: #{tpu_custom_call.1} parent=5 // pred_region
        %s155 = ssub.s32 %s21, 1
        // Predicated region
        $region13: #{tpu_custom_call.1} parent=11 // pred_check
          %p156 = pneg %p68
        $region14: #{tpu_custom_call.1} parent=11 // pred_check_branch
          %158 = sbr.rel (%p156) target = $region16
        $region15: #{tpu_custom_call.1} parent=11 // pred_region
          %160 = vsyncadd [#allocation6], 0
          %s161 = sshll.u32 %s1, 4
          %s162 = int_to_ptr.hbm [resolvable:$true] %s161
          %s163 = sshll.u32 [#allocation5], 4
          %s164 = int_to_ptr.vmem [resolvable:$true] %s163
          %169 = dma.hbm_to_vmem [thread:$0]  %s162, 768, %s164, [#allocation6], 64, 64, 4
        $region16: #{tpu_custom_call.1} parent=11 // pred_fallthru
          _
        // Predicated region
        $region17: #{tpu_custom_call.1} parent=11 // pred_check
          %p170 = pneg %p89
        $region18: #{tpu_custom_call.1} parent=11 // pred_check_branch
          %172 = sbr.rel (%p170) target = $region20
        $region19: #{tpu_custom_call.1} parent=11 // pred_region
          %174 = vsyncadd [#allocation6], 0
          %s175 = sshll.u32 %s2, 4
          %s176 = int_to_ptr.hbm [resolvable:$true] %s175
          %s177 = sshll.u32 [#allocation7], 4
          %s178 = int_to_ptr.vmem [resolvable:$true] %s177
          %183 = dma.hbm_to_vmem [thread:$0]  %s176, 48, %s178, [#allocation6], 16, 16, 1
        $region20: #{tpu_custom_call.1} parent=11 // pred_fallthru
          _
      $region12: #{tpu_custom_call.1} parent=5 // pred_fallthru
        _
      %p184 = scmp.lt.s32.totalorder %s21, 2
      // Predicated region
      $region21: #{tpu_custom_call.1} parent=5 // pred_check
        %p185 = pneg %p184
      $region22: #{tpu_custom_call.1} parent=5 // pred_check_branch
        %187 = sbr.rel (%p185) target = $region24
      $region23: #{tpu_custom_call.1} parent=5 // pred_region
        // Predicated region
        $region25: #{tpu_custom_call.1} parent=23 // pred_check
          %p188 = pneg %p41
        $region26: #{tpu_custom_call.1} parent=23 // pred_check_branch
          %190 = sbr.rel (%p188) target = $region28
        $region27: #{tpu_custom_call.1} parent=23 // pred_region
          %s191 = sand.u32 %s31, 1
          %s192 = scalar_lea.sflag [#allocation3], %s191
          %s193 = sand.u32 %s31, 1
          %s194 = smul.addr %s193, 8
          %s195 = scalar_lea.vmem [#allocation2], %s194
          %197 = vsyncadd %s192, 0
          %s198 = smul.addr %s21, 8
          %s199 = scalar_lea.hbm %s0, %s198
          %s201 = sshll.u32 %s199, 4
          %s202 = int_to_ptr.hbm [resolvable:$true] %s201
          %s203 = sshll.u32 %s195, 4
          %s204 = int_to_ptr.vmem [resolvable:$true] %s203
          %206 = dma.hbm_to_vmem [thread:$0]  %s202, 128, %s204, %s192
        $region28: #{tpu_custom_call.1} parent=23 // pred_fallthru
          _
      $region24: #{tpu_custom_call.1} parent=5 // pred_fallthru
        _
      %p207 = scmp.le.s32.totalorder 1, %s21
      %p208 = scmp.lt.s32.totalorder %s21, 3
      %p209 = pnand %p207, %p208
      %p210 = pneg %p209
      // Predicated region
      $region29: #{tpu_custom_call.1} parent=5 // pred_check
        _
      $region30: #{tpu_custom_call.1} parent=5 // pred_check_branch
        %212 = sbr.rel (%p209) target = $region32
      $region31: #{tpu_custom_call.1} parent=5 // pred_region
        %s213 = ssub.s32 %s21, 1
        %s214 = sand.u32 %s34, 1
        %s215 = scalar_lea.sflag [#allocation3], %s214
        %s216 = sand.u32 %s34, 1
        %s217 = smul.addr %s216, 8
        %s218 = scalar_lea.vmem [#allocation2], %s217
        // Predicated region
        $region33: #{tpu_custom_call.1} parent=31 // pred_check
          %p219 = pneg %p47
        $region34: #{tpu_custom_call.1} parent=31 // pred_check_branch
          %221 = sbr.rel (%p219) target = $region36
        $region35: #{tpu_custom_call.1} parent=31 // pred_region
          %223 = dma.done %s215, 128
        $region36: #{tpu_custom_call.1} parent=31 // pred_fallthru
          _
        // Predicated region
        $region37: #{tpu_custom_call.1} parent=31 // pred_check
          %p224 = pneg %p68
        $region38: #{tpu_custom_call.1} parent=31 // pred_check_branch
          %226 = sbr.rel (%p224) target = $region40
        $region39: #{tpu_custom_call.1} parent=31 // pred_region
          %228 = dma.done [#allocation6], 768
        $region40: #{tpu_custom_call.1} parent=31 // pred_fallthru
          _
        // Predicated region
        $region41: #{tpu_custom_call.1} parent=31 // pred_check
          %p229 = pneg %p89
        $region42: #{tpu_custom_call.1} parent=31 // pred_check_branch
          %231 = sbr.rel (%p229) target = $region44
        $region43: #{tpu_custom_call.1} parent=31 // pred_region
          %233 = dma.done [#allocation6], 48
        $region44: #{tpu_custom_call.1} parent=31 // pred_fallthru
          _
        %s234 = sand.u32 %s34, 1
        %s235 = scalar_lea.sflag [#allocation3], %s234
        %s236 = sand.u32 %s34, 1
        %s237 = smul.addr %s236, 8
        %s238 = scalar_lea.vmem [#allocation2], %s237
        %p239 = pneg %p47
        %p240 = pneg %p44
        %p241 = pneg %p68
        %p242 = pneg %p65
        %p243 = pneg %p89
        %p244 = pneg %p86
        %p245 = pneg %p115
        %p246 = pneg %p112
        %s247 = sand.u32 %s102, 1
        %s248 = scalar_lea.sflag [#allocation4], %s247
        %s249 = sand.u32 %s102, 1
        %s250 = smul.addr %s249, 8
        %s251 = scalar_lea.vmem [#allocation8], %s250
        %p252 = pneg %p141
        %p253 = pneg %p138
        %s254 = sand.u32 %s128, 1
        %s255 = scalar_lea.sflag [#allocation10], %s254
        %s256 = sand.u32 %s128, 1
        %s257 = smul.addr %s256, 8
        %s258 = scalar_lea.vmem [#allocation9], %s257
        %v260 = vld [vmem:[%s218] sm:$0xff]
        %v261 = vpack.c.bf16 %v260, %v260
        %v262 = vld [vmem:[#allocation5] sm:$0xf]
        %v263 = vld [vmem:[#allocation5 + $0x4] sm:$0xf]
        %v264 = vld [vmem:[#allocation5 + $0x8] sm:$0xf]
        %v265 = vld [vmem:[#allocation5 + $0xc] sm:$0xf]
        %v266 = vld [vmem:[#allocation7] sm:$0x1]
        %v268 = vperm.slane %v266, 0
        %v274 = vunpack.c.l.b16 %v262
        %v275 = vunpack.c.l.b16 %v263
        %v276 = vunpack.c.l.b16 %v264
        %v277 = vunpack.c.l.b16 %v265
        %v278 = vpack.c.b16 %v275, %v274
        %v279 = vpack.c.b16 %v277, %v276
        %vm282 = vcmask 261120
        %v284 = vsel %vm282, %v261, 0
        %286 = vmatpush.bf16.msra.mxu0 0
        %287 = vmatpush.bf16.msra.mxu0 0
        %288 = vmatpush.bf16.msra.mxu0 0
        %289 = vmatpush.bf16.msra.mxu0 0
        %290 = vmatpush.bf16.msra.mxu0 0
        %291 = vmatpush.bf16.msra.mxu0 0
        %292 = vmatpush.bf16.msra.mxu0 %v279
        %293 = vmatpush.bf16.msra.mxu0 %v278
        %294 = vmatmul.bf16.gmra.mxu0 %v284
        %v295 = vpop.f32.mrf.mxu0
        %v296 = vadd.f32 %v268, %v295
        %v297 = vpop.f32.mrf.mxu0
        %298 = vdwg.mxu0
        %s299 = scalar_lea.vmem [#allocation5], 16
        %v300 = vld [vmem:[%s299] sm:$0xf]
        %v301 = vld [vmem:[%s299 + $0x4] sm:$0xf]
        %v302 = vld [vmem:[%s299 + $0x8] sm:$0xf]
        %v303 = vld [vmem:[%s299 + $0xc] sm:$0xf]
        %s304 = scalar_lea.vmem [#allocation7], 1
        %v305 = vld [vmem:[%s304] sm:$0x1]
        %v307 = vperm.slane %v305, 0
        %v313 = vunpack.c.l.b16 %v300
        %v314 = vunpack.c.l.b16 %v301
        %v315 = vunpack.c.l.b16 %v302
        %v316 = vunpack.c.l.b16 %v303
        %v317 = vpack.c.b16 %v314, %v313
        %v318 = vpack.c.b16 %v316, %v315
        %321 = vmatpush.bf16.msra.mxu0 0
        %322 = vmatpush.bf16.msra.mxu0 0
        %323 = vmatpush.bf16.msra.mxu0 0
        %324 = vmatpush.bf16.msra.mxu0 0
        %325 = vmatpush.bf16.msra.mxu0 0
        %326 = vmatpush.bf16.msra.mxu0 0
        %327 = vmatpush.bf16.msra.mxu0 %v318
        %328 = vmatpush.bf16.msra.mxu0 %v317
        %329 = vmatmul.bf16.gmra.mxu0 %v284
        %v330 = vpop.f32.mrf.mxu0
        %v331 = vadd.f32 %v307, %v330
        %v332 = vpop.f32.mrf.mxu0
        %333 = vdwg.mxu0
        %s334 = scalar_lea.vmem [#allocation5], 32
        %v335 = vld [vmem:[%s334] sm:$0xf]
        %v336 = vld [vmem:[%s334 + $0x4] sm:$0xf]
        %v337 = vld [vmem:[%s334 + $0x8] sm:$0xf]
        %v338 = vld [vmem:[%s334 + $0xc] sm:$0xf]
        %s339 = scalar_lea.vmem [#allocation7], 2
        %v340 = vld [vmem:[%s339] sm:$0x1]
        %v342 = vperm.slane %v340, 0
        %v348 = vunpack.c.l.b16 %v335
        %v349 = vunpack.c.l.b16 %v336
        %v350 = vunpack.c.l.b16 %v337
        %v351 = vunpack.c.l.b16 %v338
        %v352 = vpack.c.b16 %v349, %v348
        %v353 = vpack.c.b16 %v351, %v350
        %356 = vmatpush.bf16.msra.mxu0 0
        %357 = vmatpush.bf16.msra.mxu0 0
        %358 = vmatpush.bf16.msra.mxu0 0
        %359 = vmatpush.bf16.msra.mxu0 0
        %360 = vmatpush.bf16.msra.mxu0 0
        %361 = vmatpush.bf16.msra.mxu0 0
        %362 = vmatpush.bf16.msra.mxu0 %v353
        %363 = vmatpush.bf16.msra.mxu0 %v352
        %364 = vmatmul.bf16.gmra.mxu0 %v284
        %v365 = vpop.f32.mrf.mxu0
        %v366 = vadd.f32 %v342, %v365
        %v367 = vpop.f32.mrf.mxu0
        %368 = vdwg.mxu0
        %v369 = vpack.c.bf16 %v296, %v296
        %v370 = vpack.c.bf16 %v331, %v331
        %v372 = vsel %vm282, %v369, 0
        %v375 = vsel %vm282, %v370, 0
        %377 = vmatpush.bf16.xpose.msra.mxu0 0
        %378 = vmatpush.bf16.xpose.msra.mxu0 0
        %379 = vmatpush.bf16.xpose.msra.mxu0 0
        %380 = vmatpush.bf16.xpose.msra.mxu0 0
        %381 = vmatpush.bf16.xpose.msra.mxu0 0
        %382 = vmatpush.bf16.xpose.msra.mxu0 0
        %383 = vmatpush.bf16.xpose.msra.mxu0 0
        %384 = vmatpush.bf16.xpose.msra.mxu0 %v375
        %385 = vmatmul.bf16.gmra.mxu0 %v372
        %v386 = vpop.f32.mrf.mxu0
        %v387 = vadd.f32 0.0, %v386
        %v388 = vpop.f32.mrf.mxu0
        %389 = vdwg.mxu0
        %vm390 = vcmask 64512
        %v391 = vsel %vm390, %v387, -inf
        %392 = vmax.xlane.f32.xlu0 %v391
        %v393 = vpop.xlane.xlu0 %392
        %v394 = vsub.f32 %v387, %v393
        %v395 = vmul.f32 %v394, 1.442695
        %v396 = vpow.pop %v395
        %v397 = vsel %vm390, %v396, 0.0
        %398 = vadd.xlane.f32.xlu0 %v397
        %v399 = vpop.xlane.xlu0 %398
        %v400 = vpack.c.bf16 %v366, %v366
        %v401 = vrcp.pop %v399
        %v402 = vmul.f32 %v399, %v401
        %v403 = vsub.f32 1.0, %v402
        %v404 = vmul.f32 %v401, %v403
        %v405 = vadd.f32 %v401, %v404
        %vm406 = vweird.f32 %v399
        %vm407 = vweird.f32 %v401
        %vm408 = vmor %vm406, %vm407
        %v409 = vsel %vm408, %v401, %v405
        %v410 = vand.u32 2147483647, %v399
        %vm411 = vcmp.eq.f32.partialorder %v410, 8.507059e+37
        %v412 = vand.u32 %v399, 2147483648
        %v413 = vor.u32 1.1754944e-38, %v412
        %v414 = vsel %vm411, %v413, %v409
        %v415 = vmul.f32 %v396, %v414
        %v416 = vpack.c.bf16 %v415, %v415
        %v418 = vsel %vm390, %v416, 0
        %vm420 = vcmask 1043456
        %v422 = vsel %vm420, %v400, 0
        %424 = vmatpush.bf16.msra.mxu0 0
        %425 = vmatpush.bf16.msra.mxu0 0
        %426 = vmatpush.bf16.msra.mxu0 0
        %427 = vmatpush.bf16.msra.mxu0 0
        %428 = vmatpush.bf16.msra.mxu0 0
        %429 = vmatpush.bf16.msra.mxu0 0
        %430 = vmatpush.bf16.msra.mxu0 0
        %431 = vmatpush.bf16.msra.mxu0 %v422
        %432 = vmatmul.bf16.gmra.mxu0 %v418
        %v433 = vpop.f32.mrf.mxu0
        %v434 = vadd.f32 0.0, %v433
        %v435 = vpop.f32.mrf.mxu0
        %436 = vdwg.mxu0
        %437 = vst.msk [vmem:[%s258] sm:$0xff] %vm390, %v415
        %438 = vst.msk [vmem:[%s251] sm:$0xff] %vm282, %v434
        %s439 = sand.u32 %s102, 1
        %s440 = scalar_lea.sflag [#allocation4], %s439
        %s441 = sand.u32 %s102, 1
        %s442 = smul.addr %s441, 8
        %s443 = scalar_lea.vmem [#allocation8], %s442
        %s444 = sand.u32 %s128, 1
        %s445 = scalar_lea.sflag [#allocation10], %s444
        %s446 = sand.u32 %s128, 1
        %s447 = smul.addr %s446, 8
        %s448 = scalar_lea.vmem [#allocation9], %s447
        // Predicated region
        $region45: #{tpu_custom_call.1} parent=31 // pred_check
          %p449 = pneg %p112
        $region46: #{tpu_custom_call.1} parent=31 // pred_check_branch
          %451 = sbr.rel (%p449) target = $region48
        $region47: #{tpu_custom_call.1} parent=31 // pred_region
          %453 = vsyncadd %s440, 0
          %s454 = smul.addr %s26, 8
          %s455 = scalar_lea.hbm %s3, %s454
          %s457 = sshll.u32 %s443, 4
          %s458 = int_to_ptr.vmem [resolvable:$true] %s457
          %s459 = sshll.u32 %s455, 4
          %s460 = int_to_ptr.hbm [resolvable:$true] %s459
          %462 = dma.vmem_to_hbm [thread:$0]  %s458, 128, %s460, %s440
        $region48: #{tpu_custom_call.1} parent=31 // pred_fallthru
          _
        // Predicated region
        $region49: #{tpu_custom_call.1} parent=31 // pred_check
          %p463 = pneg %p138
        $region50: #{tpu_custom_call.1} parent=31 // pred_check_branch
          %465 = sbr.rel (%p463) target = $region52
        $region51: #{tpu_custom_call.1} parent=31 // pred_region
          %467 = vsyncadd %s445, 0
          %s468 = smul.addr %s26, 8
          %s469 = scalar_lea.hbm %s4, %s468
          %s471 = sshll.u32 %s448, 4
          %s472 = int_to_ptr.vmem [resolvable:$true] %s471
          %s473 = sshll.u32 %s469, 4
          %s474 = int_to_ptr.hbm [resolvable:$true] %s473
          %476 = dma.vmem_to_hbm [thread:$0]  %s472, 128, %s474, %s445
        $region52: #{tpu_custom_call.1} parent=31 // pred_fallthru
          _
      $region32: #{tpu_custom_call.1} parent=5 // pred_fallthru
        _
      %p477 = scmp.le.s32.totalorder 2, %s21
      // Predicated region
      $region53: #{tpu_custom_call.1} parent=5 // pred_check
        %p478 = pneg %p477
      $region54: #{tpu_custom_call.1} parent=5 // pred_check_branch
        %480 = sbr.rel (%p478) target = $region56
      $region55: #{tpu_custom_call.1} parent=5 // pred_region
        %s481 = ssub.s32 %s21, 2
        // Predicated region
        $region57: #{tpu_custom_call.1} parent=55 // pred_check
          %p482 = pneg %p118
        $region58: #{tpu_custom_call.1} parent=55 // pred_check_branch
          %484 = sbr.rel (%p482) target = $region60
        $region59: #{tpu_custom_call.1} parent=55 // pred_region
          %s485 = sand.u32 %s103, 1
          %s486 = scalar_lea.sflag [#allocation4], %s485
          %s487 = sand.u32 %s103, 1
          %s488 = smul.addr %s487, 8
          %s489 = scalar_lea.vmem [#allocation8], %s488
          %491 = dma.done %s486, 128
        $region60: #{tpu_custom_call.1} parent=55 // pred_fallthru
          _
        // Predicated region
        $region61: #{tpu_custom_call.1} parent=55 // pred_check
          %p492 = pneg %p144
        $region62: #{tpu_custom_call.1} parent=55 // pred_check_branch
          %494 = sbr.rel (%p492) target = $region64
        $region63: #{tpu_custom_call.1} parent=55 // pred_region
          %s495 = sand.u32 %s129, 1
          %s496 = scalar_lea.sflag [#allocation10], %s495
          %s497 = sand.u32 %s129, 1
          %s498 = smul.addr %s497, 8
          %s499 = scalar_lea.vmem [#allocation9], %s498
          %501 = dma.done %s496, 128
        $region64: #{tpu_custom_call.1} parent=55 // pred_fallthru
          _
      $region56: #{tpu_custom_call.1} parent=5 // pred_fallthru
        _
    $region6: #{tpu_custom_call.1} parent=1 // loop_footer
      %s25 = sadd.s32 1, %s21
    $region7: #{tpu_custom_call.1} parent=1 // loop_footer_branch
      %20 = sbr.rel target = $region3
    $region8: #{tpu_custom_call.1} parent=1 // loop_exit
      _
    %502 = vsyncpa [#allocation3], 1
    %s503 = scalar_lea.sflag [#allocation3], 1
    %504 = vsyncpa %s503, 1
    %505 = vsyncpa [#allocation6], 1
    %506 = vsyncpa [#allocation4], 1
    %s507 = scalar_lea.sflag [#allocation4], 1
    %508 = vsyncpa %s507, 1
    %509 = vsyncpa [#allocation10], 1
    %s510 = scalar_lea.sflag [#allocation10], 1
    %511 = vsyncpa %s510, 1

</llo_original>
